<compile_context>
chip_gen: v5e
topology: v5e:2x2
jax: 0.10.0
libtpu: 0.0.40
codegen_flags: <defaults>
</compile_context>

<pallas_src>
import functools

import jax
import jax.numpy as jnp
from jax.experimental import pallas as pl
from jax.experimental.pallas import tpu as pltpu

_LANE = 128


def _round_up(x, m):
    return ((x + m - 1) // m) * m


def _pad_axis(a, axis, target):
    pad = target - a.shape[axis]
    if pad == 0:
        return a
    widths = [(0, 0)] * a.ndim
    widths[axis] = (0, pad)
    return jnp.pad(a, widths)


def _cond_mlp_kernel(xq_ref, nz_ref,
                     w1x_ref, w1n_ref, b1_ref,
                     w2_ref, b2_ref,
                     w3_ref, b3_ref,
                     w4_ref, b4_ref,
                     o_ref):
    """Fused forward for one batch tile: 3x (Linear + LeakyReLU(0.1)) + Linear."""

    def lrelu(h):
        return jnp.where(h > 0, h, 0.1 * h)

    # Hoist the small (1, N) bias loads ahead of the matmul chain.
    b1 = b1_ref[...]
    b2 = b2_ref[...]
    b3 = b3_ref[...]
    b4 = b4_ref[...]

    xq = xq_ref[...]
    nz = nz_ref[...]

    # Layer 1 with the concat folded in: [X_q | noise] @ W1 == X_q@W1x + noise@W1n
    h = (jnp.dot(xq, w1x_ref[...], preferred_element_type=jnp.float32)
         + jnp.dot(nz, w1n_ref[...], preferred_element_type=jnp.float32)
         + b1)
    h = lrelu(h)

    h = lrelu(jnp.dot(h, w2_ref[...], preferred_element_type=jnp.float32) + b2)
    h = lrelu(jnp.dot(h, w3_ref[...], preferred_element_type=jnp.float32) + b3)

    out = jnp.dot(h, w4_ref[...], preferred_element_type=jnp.float32) + b4
    o_ref[...] = out.astype(o_ref.dtype)


def init_cond_mlp_params(key, seed_dim, cond_len, seq_len, hidden_dim=256,
                         dtype=jnp.float32):
    """Params mimicking torch.nn.Linear default init
    (uniform(-1/sqrt(fan_in), 1/sqrt(fan_in)))."""
    in_dim = seed_dim + cond_len
    out_dim = seq_len - cond_len
    dims = [(in_dim, hidden_dim),
            (hidden_dim, hidden_dim),
            (hidden_dim, hidden_dim),
            (hidden_dim, out_dim)]
    params = []
    for (fan_in, fan_out) in dims:
        key, kw, kb = jax.random.split(key, 3)
        bound = 1.0 / jnp.sqrt(jnp.asarray(fan_in, jnp.float32))
        # weight stored as (in, out) so the kernel does x @ W directly
        w = jax.random.uniform(kw, (fan_in, fan_out), dtype, -bound, bound)
        b = jax.random.uniform(kb, (1, fan_out), dtype, -bound, bound)
        params.append((w, b))
    return params


@functools.partial(jax.jit, static_argnames=("tile_b",))
def cond_mlp_forward(X_q, noise, params, tile_b=256):
    """X_q: (B, cond_len); noise: (B, seed_dim) -> (B, seq_len - cond_len)."""
    (w1, b1), (w2, b2), (w3, b3), (w4, b4) = params
    B, cond_len = X_q.shape
    seed_dim = noise.shape[1]
    hidden = w1.shape[1]
    out_dim = w4.shape[1]

    # Lane-dense padded feature dims (zero padding; exact under LeakyReLU).
    Hp = _round_up(hidden, _LANE)
    Op = _round_up(out_dim, _LANE)

    # Split W1 by input rows in torch.cat((X_q, noise), dim=1) order.
    w1x = _pad_axis(w1[:cond_len], 1, Hp)
    w1n = _pad_axis(w1[cond_len:], 1, Hp)
    b1p = _pad_axis(b1, 1, Hp)
    w2p = _pad_axis(_pad_axis(w2, 0, Hp), 1, Hp)
    b2p = _pad_axis(b2, 1, Hp)
    w3p = _pad_axis(_pad_axis(w3, 0, Hp), 1, Hp)
    b3p = _pad_axis(b3, 1, Hp)
    w4p = _pad_axis(_pad_axis(w4, 0, Hp), 1, Op)
    b4p = _pad_axis(b4, 1, Op)

    # Batch tile: multiple of 8 sublanes, modest size keeps double-buffered
    # x/out tiles well inside v7x's smaller (64 MiB / 32 MiB scoped) VMEM.
    TILE_B = min(int(tile_b), _round_up(B, 8))
    TILE_B = _round_up(TILE_B, 8)
    Bp = _round_up(B, TILE_B)
    Xq_p = _pad_axis(X_q, 0, Bp)
    nz_p = _pad_axis(noise, 0, Bp)

    n_steps = Bp // TILE_B

    batch_spec = lambda cols: pl.BlockSpec((TILE_B, cols), lambda i: (i, 0))
    const_spec = lambda a: pl.BlockSpec(a.shape, lambda i: (0, 0))

    flops = 2 * Bp * (cond_len * Hp + seed_dim * Hp + 2 * Hp * Hp + Hp * Op)
    bytes_accessed = 4 * (
        Bp * (cond_len + seed_dim + Op)
        + (cond_len + seed_dim) * Hp + 2 * Hp * Hp + Hp * Op
        + 3 * Hp + Op)

    out_padded = pl.pallas_call(
        _cond_mlp_kernel,
        out_shape=jax.ShapeDtypeStruct((Bp, Op), X_q.dtype),
        grid=(n_steps,),
        in_specs=[batch_spec(cond_len),      # X_q tile
                  batch_spec(seed_dim),      # noise tile
                  const_spec(w1x), const_spec(w1n), const_spec(b1p),
                  const_spec(w2p), const_spec(b2p),
                  const_spec(w3p), const_spec(b3p),
                  const_spec(w4p), const_spec(b4p)],
        out_specs=pl.BlockSpec((TILE_B, Op), lambda i: (i, 0)),
        compiler_params=pltpu.CompilerParams(
            dimension_semantics=("parallel",)),
        cost_estimate=pl.CostEstimate(
            flops=flops, transcendentals=0, bytes_accessed=bytes_accessed),
    )(Xq_p, nz_p, w1x, w1n, b1p, w2p, b2p, w3p, b3p, w4p, b4p)

    return out_padded[:B, :out_dim]


def cond_mlp_reference(X_q, noise, params):
    """Pure-JAX reference for correctness checking."""
    x = jnp.concatenate([X_q, noise], axis=1)
    (w1, b1), (w2, b2), (w3, b3), (w4, b4) = params
    lrelu = lambda h: jnp.where(h > 0, h, 0.1 * h)
    h = lrelu(x @ w1 + b1)
    h = lrelu(h @ w2 + b2)
    h = lrelu(h @ w3 + b3)
    return h @ w4 + b4


if __name__ == "__main__":
    # Small, module-consistent shapes.
    batch = 8
    seed_dim = 4      # dimension of the random seed
    cond_len = 8      # q
    seq_len = 16      # p  -> output width = p - q = 8
    hidden_dim = 32

    key = jax.random.PRNGKey(0)
    k_params, k_xq, k_noise = jax.random.split(key, 3)

    params = init_cond_mlp_params(k_params, seed_dim, cond_len, seq_len,
                                  hidden_dim)
    X_q = jax.random.normal(k_xq, (batch, cond_len), jnp.float32)
    noise = jax.random.normal(k_noise, (batch, seed_dim), jnp.float32)

    out = cond_mlp_forward(X_q, noise, params)
    out = jax.block_until_ready(out)

    ref = cond_mlp_reference(X_q, noise, params)
    assert out.shape == (batch, seq_len - cond_len), out.shape
    assert jnp.allclose(out, ref, atol=1e-5, rtol=1e-5), "mismatch vs reference"

    print("KERNEL_OK")
</pallas_src>

<mosaic_0001>
module attributes {stable_mosaic.version = 11 : i64} {
  func.func @_cond_mlp_kernel(%arg0: i32, %arg1: memref<8x8xf32, #tpu.memory_space<vmem>>, %arg2: memref<8x4xf32, #tpu.memory_space<vmem>>, %arg3: memref<8x128xf32, #tpu.memory_space<vmem>>, %arg4: memref<4x128xf32, #tpu.memory_space<vmem>>, %arg5: memref<1x128xf32, #tpu.memory_space<vmem>>, %arg6: memref<128x128xf32, #tpu.memory_space<vmem>>, %arg7: memref<1x128xf32, #tpu.memory_space<vmem>>, %arg8: memref<128x128xf32, #tpu.memory_space<vmem>>, %arg9: memref<1x128xf32, #tpu.memory_space<vmem>>, %arg10: memref<128x128xf32, #tpu.memory_space<vmem>>, %arg11: memref<1x128xf32, #tpu.memory_space<vmem>>, %arg12: memref<8x128xf32, #tpu.memory_space<vmem>>) attributes {dimension_semantics = [#tpu.dimension_semantics<parallel>], iteration_bounds = array<i64: 1>, scalar_prefetch = 0 : i64, scratch_operands = 0 : i64, tpu.core_type = #tpu.core_type<tc>, window_params = [{transform_indices = @transform_0, window_bounds = array<i64: 8, 8>}, {transform_indices = @transform_1, window_bounds = array<i64: 8, 4>}, {pipeline_mode = #tpu.pipeline_mode<synchronous>, transform_indices = @transform_2, window_bounds = array<i64: 8, 128>}, {pipeline_mode = #tpu.pipeline_mode<synchronous>, transform_indices = @transform_3, window_bounds = array<i64: 4, 128>}, {pipeline_mode = #tpu.pipeline_mode<synchronous>, transform_indices = @transform_4, window_bounds = array<i64: 1, 128>}, {pipeline_mode = #tpu.pipeline_mode<synchronous>, transform_indices = @transform_5, window_bounds = array<i64: 128, 128>}, {pipeline_mode = #tpu.pipeline_mode<synchronous>, transform_indices = @transform_6, window_bounds = array<i64: 1, 128>}, {pipeline_mode = #tpu.pipeline_mode<synchronous>, transform_indices = @transform_7, window_bounds = array<i64: 128, 128>}, {pipeline_mode = #tpu.pipeline_mode<synchronous>, transform_indices = @transform_8, window_bounds = array<i64: 1, 128>}, {pipeline_mode = #tpu.pipeline_mode<synchronous>, transform_indices = @transform_9, window_bounds = array<i64: 128, 128>}, {pipeline_mode = #tpu.pipeline_mode<synchronous>, transform_indices = @transform_10, window_bounds = array<i64: 1, 128>}, {transform_indices = @transform_11, window_bounds = array<i64: 8, 128>}]} {
    %c0 = arith.constant 0 : index
    %c0_0 = arith.constant 0 : index
    %0 = vector.load %arg5[%c0, %c0_0] : memref<1x128xf32, #tpu.memory_space<vmem>>, vector<1x128xf32>
    %c0_1 = arith.constant 0 : index
    %c0_2 = arith.constant 0 : index
    %1 = vector.load %arg7[%c0_1, %c0_2] : memref<1x128xf32, #tpu.memory_space<vmem>>, vector<1x128xf32>
    %c0_3 = arith.constant 0 : index
    %c0_4 = arith.constant 0 : index
    %2 = vector.load %arg9[%c0_3, %c0_4] : memref<1x128xf32, #tpu.memory_space<vmem>>, vector<1x128xf32>
    %c0_5 = arith.constant 0 : index
    %c0_6 = arith.constant 0 : index
    %3 = vector.load %arg11[%c0_5, %c0_6] : memref<1x128xf32, #tpu.memory_space<vmem>>, vector<1x128xf32>
    %c0_7 = arith.constant 0 : index
    %c0_8 = arith.constant 0 : index
    %4 = vector.load %arg1[%c0_7, %c0_8] : memref<8x8xf32, #tpu.memory_space<vmem>>, vector<8x8xf32>
    %c0_9 = arith.constant 0 : index
    %c0_10 = arith.constant 0 : index
    %5 = vector.load %arg2[%c0_9, %c0_10] : memref<8x4xf32, #tpu.memory_space<vmem>>, vector<8x4xf32>
    %c0_11 = arith.constant 0 : index
    %c0_12 = arith.constant 0 : index
    %6 = vector.load %arg3[%c0_11, %c0_12] : memref<8x128xf32, #tpu.memory_space<vmem>>, vector<8x128xf32>
    %cst = arith.constant dense<0.000000e+00> : vector<8x128xf32>
    %7 = tpu.matmul %4, %6, %cst {dimension_numbers = #tpu.dot_dimension_numbers<[1], [0], [0], [1], [0, 0, 1, 1], [], []>} : vector<8x8xf32>, vector<8x128xf32>, vector<8x128xf32> -> vector<8x128xf32>
    %c0_13 = arith.constant 0 : index
    %c0_14 = arith.constant 0 : index
    %8 = vector.load %arg4[%c0_13, %c0_14] : memref<4x128xf32, #tpu.memory_space<vmem>>, vector<4x128xf32>
    %cst_15 = arith.constant dense<0.000000e+00> : vector<8x128xf32>
    %9 = tpu.matmul %5, %8, %cst_15 {dimension_numbers = #tpu.dot_dimension_numbers<[1], [0], [0], [1], [0, 0, 1, 1], [], []>} : vector<8x4xf32>, vector<4x128xf32>, vector<8x128xf32> -> vector<8x128xf32>
    %10 = arith.addf %7, %9 : vector<8x128xf32>
    %11 = vector.broadcast %0 : vector<1x128xf32> to vector<8x128xf32>
    %12 = arith.addf %10, %11 : vector<8x128xf32>
    %cst_16 = arith.constant 0.000000e+00 : f32
    %13 = vector.broadcast %cst_16 : f32 to vector<8x128xf32>
    %14 = arith.cmpf ogt, %12, %13 : vector<8x128xf32>
    %cst_17 = arith.constant 1.000000e-01 : f32
    %15 = vector.broadcast %cst_17 : f32 to vector<8x128xf32>
    %16 = arith.mulf %15, %12 : vector<8x128xf32>
    %17 = arith.select %14, %12, %16 : vector<8x128xi1>, vector<8x128xf32>
    %c0_18 = arith.constant 0 : index
    %c0_19 = arith.constant 0 : index
    %18 = vector.load %arg6[%c0_18, %c0_19] : memref<128x128xf32, #tpu.memory_space<vmem>>, vector<128x128xf32>
    %cst_20 = arith.constant dense<0.000000e+00> : vector<8x128xf32>
    %19 = tpu.matmul %17, %18, %cst_20 {dimension_numbers = #tpu.dot_dimension_numbers<[1], [0], [0], [1], [0, 0, 1, 1], [], []>} : vector<8x128xf32>, vector<128x128xf32>, vector<8x128xf32> -> vector<8x128xf32>
    %20 = vector.broadcast %1 : vector<1x128xf32> to vector<8x128xf32>
    %21 = arith.addf %19, %20 : vector<8x128xf32>
    %cst_21 = arith.constant 0.000000e+00 : f32
    %22 = vector.broadcast %cst_21 : f32 to vector<8x128xf32>
    %23 = arith.cmpf ogt, %21, %22 : vector<8x128xf32>
    %cst_22 = arith.constant 1.000000e-01 : f32
    %24 = vector.broadcast %cst_22 : f32 to vector<8x128xf32>
    %25 = arith.mulf %24, %21 : vector<8x128xf32>
    %26 = arith.select %23, %21, %25 : vector<8x128xi1>, vector<8x128xf32>
    %c0_23 = arith.constant 0 : index
    %c0_24 = arith.constant 0 : index
    %27 = vector.load %arg8[%c0_23, %c0_24] : memref<128x128xf32, #tpu.memory_space<vmem>>, vector<128x128xf32>
    %cst_25 = arith.constant dense<0.000000e+00> : vector<8x128xf32>
    %28 = tpu.matmul %26, %27, %cst_25 {dimension_numbers = #tpu.dot_dimension_numbers<[1], [0], [0], [1], [0, 0, 1, 1], [], []>} : vector<8x128xf32>, vector<128x128xf32>, vector<8x128xf32> -> vector<8x128xf32>
    %29 = vector.broadcast %2 : vector<1x128xf32> to vector<8x128xf32>
    %30 = arith.addf %28, %29 : vector<8x128xf32>
    %cst_26 = arith.constant 0.000000e+00 : f32
    %31 = vector.broadcast %cst_26 : f32 to vector<8x128xf32>
    %32 = arith.cmpf ogt, %30, %31 : vector<8x128xf32>
    %cst_27 = arith.constant 1.000000e-01 : f32
    %33 = vector.broadcast %cst_27 : f32 to vector<8x128xf32>
    %34 = arith.mulf %33, %30 : vector<8x128xf32>
    %35 = arith.select %32, %30, %34 : vector<8x128xi1>, vector<8x128xf32>
    %c0_28 = arith.constant 0 : index
    %c0_29 = arith.constant 0 : index
    %36 = vector.load %arg10[%c0_28, %c0_29] : memref<128x128xf32, #tpu.memory_space<vmem>>, vector<128x128xf32>
    %cst_30 = arith.constant dense<0.000000e+00> : vector<8x128xf32>
    %37 = tpu.matmul %35, %36, %cst_30 {dimension_numbers = #tpu.dot_dimension_numbers<[1], [0], [0], [1], [0, 0, 1, 1], [], []>} : vector<8x128xf32>, vector<128x128xf32>, vector<8x128xf32> -> vector<8x128xf32>
    %38 = vector.broadcast %3 : vector<1x128xf32> to vector<8x128xf32>
    %39 = arith.addf %37, %38 : vector<8x128xf32>
    %c0_31 = arith.constant 0 : index
    %c0_32 = arith.constant 0 : index
    %40 = vector.load %arg12[%c0_31, %c0_32] : memref<8x128xf32, #tpu.memory_space<vmem>>, vector<8x128xf32>
    tpu.vector_store %arg12[%c0_31, %c0_32], %39 {strides = array<i32>} : memref<8x128xf32, #tpu.memory_space<vmem>>, vector<8x128xf32>,
    return
  }
  func.func @transform_0(%arg0: i32) -> (i32, i32) {
    %c0_i32 = arith.constant 0 : i32
    %c0_i32_0 = arith.constant 0 : i32
    return %arg0, %c0_i32 : i32, i32
  }
  func.func @transform_1(%arg0: i32) -> (i32, i32) {
    %c0_i32 = arith.constant 0 : i32
    %c0_i32_0 = arith.constant 0 : i32
    return %arg0, %c0_i32 : i32, i32
  }
  func.func @transform_2(%arg0: i32) -> (i32, i32) {
    %c0_i32 = arith.constant 0 : i32
    %c0_i32_0 = arith.constant 0 : i32
    %c0_i32_1 = arith.constant 0 : i32
    return %c0_i32, %c0_i32_0 : i32, i32
  }
  func.func @transform_3(%arg0: i32) -> (i32, i32) {
    %c0_i32 = arith.constant 0 : i32
    %c0_i32_0 = arith.constant 0 : i32
    %c0_i32_1 = arith.constant 0 : i32
    return %c0_i32, %c0_i32_0 : i32, i32
  }
  func.func @transform_4(%arg0: i32) -> (i32, i32) {
    %c0_i32 = arith.constant 0 : i32
    %c0_i32_0 = arith.constant 0 : i32
    %c0_i32_1 = arith.constant 0 : i32
    return %c0_i32, %c0_i32_0 : i32, i32
  }
  func.func @transform_5(%arg0: i32) -> (i32, i32) {
    %c0_i32 = arith.constant 0 : i32
    %c0_i32_0 = arith.constant 0 : i32
    %c0_i32_1 = arith.constant 0 : i32
    return %c0_i32, %c0_i32_0 : i32, i32
  }
  func.func @transform_6(%arg0: i32) -> (i32, i32) {
    %c0_i32 = arith.constant 0 : i32
    %c0_i32_0 = arith.constant 0 : i32
    %c0_i32_1 = arith.constant 0 : i32
    return %c0_i32, %c0_i32_0 : i32, i32
  }
  func.func @transform_7(%arg0: i32) -> (i32, i32) {
    %c0_i32 = arith.constant 0 : i32
    %c0_i32_0 = arith.constant 0 : i32
    %c0_i32_1 = arith.constant 0 : i32
    return %c0_i32, %c0_i32_0 : i32, i32
  }
  func.func @transform_8(%arg0: i32) -> (i32, i32) {
    %c0_i32 = arith.constant 0 : i32
    %c0_i32_0 = arith.constant 0 : i32
    %c0_i32_1 = arith.constant 0 : i32
    return %c0_i32, %c0_i32_0 : i32, i32
  }
  func.func @transform_9(%arg0: i32) -> (i32, i32) {
    %c0_i32 = arith.constant 0 : i32
    %c0_i32_0 = arith.constant 0 : i32
    %c0_i32_1 = arith.constant 0 : i32
    return %c0_i32, %c0_i32_0 : i32, i32
  }
  func.func @transform_10(%arg0: i32) -> (i32, i32) {
    %c0_i32 = arith.constant 0 : i32
    %c0_i32_0 = arith.constant 0 : i32
    %c0_i32_1 = arith.constant 0 : i32
    return %c0_i32, %c0_i32_0 : i32, i32
  }
  func.func @transform_11(%arg0: i32) -> (i32, i32) {
    %c0_i32 = arith.constant 0 : i32
    %c0_i32_0 = arith.constant 0 : i32
    return %arg0, %c0_i32 : i32, i32
  }
}

</mosaic_0001>

<llo_original>
// kernel: cond_mlp_forward.1
$region0: #{cond_mlp_forward.1}
  #allocation0 [shape = 'u32[]', space=smem, size = 0x4, offset = 0x4, fixed_abs, tag = 'smem constant byte address 0x4 - core index']
  #allocation1 [shape = 'u32[72,128]{1,0:T(1,128)}', space=vmem, size = 0x9000, scoped, tag = 'internal scratch']
  %s0 = inlined_call_operand.vmem [shape: f32[8,8], index: 0, kind: input, shape index: {}]
  %s1 = inlined_call_operand.vmem [shape: f32[8,4], index: 1, kind: input, shape index: {}]
  %s2 = inlined_call_operand.vmem [shape: f32[8,128], index: 2, kind: input, shape index: {}]
  %s3 = inlined_call_operand.vmem [shape: f32[4,128], index: 3, kind: input, shape index: {}]
  %s4 = inlined_call_operand.vmem [shape: f32[1,128], index: 4, kind: input, shape index: {}]
  %s5 = inlined_call_operand.vmem [shape: f32[128,128], index: 5, kind: input, shape index: {}]
  %s6 = inlined_call_operand.vmem [shape: f32[1,128], index: 6, kind: input, shape index: {}]
  %s7 = inlined_call_operand.vmem [shape: f32[128,128], index: 7, kind: input, shape index: {}]
  %s8 = inlined_call_operand.vmem [shape: f32[1,128], index: 8, kind: input, shape index: {}]
  %s9 = inlined_call_operand.vmem [shape: f32[128,128], index: 9, kind: input, shape index: {}]
  %s10 = inlined_call_operand.vmem [shape: f32[1,128], index: 10, kind: input, shape index: {}]
  %s11 = inlined_call_operand.hbm [shape: f32[8,128], index: 11, kind: output, shape index: {}]
  %s12 = sld [smem:[#allocation0]]
  $region54: #{cond_mlp_forward.1} parent=0
    _
  %s14 = ssub.s32 1, %s12
  %s15 = scalar_select 0, %s14, %s12
  $region1: #{cond_mlp_forward.1} parent=0
    #allocation2 [shape = 'u8[4096]{0}', space=vmem, size = 0x1000, scoped, tag = 'output window, operand 0, single buffered']
    #allocation3 [shape = 's32[1]{0}', space=sflag, size = 0x4, scoped, tag = 'scoped memory for cond_mlp_forward.1']
    %16 = vsyncpa [#allocation3], 0
    // Predicated region
    $region2: #{cond_mlp_forward.1} parent=1 // pred_check
      _
    $region3: #{cond_mlp_forward.1} parent=1 // pred_check_branch
      %18 = sbr.rel (0) target = $region5
    $region4: #{cond_mlp_forward.1} parent=1 // pred_region
      _
    $region5: #{cond_mlp_forward.1} parent=1 // pred_fallthru
      _
    // Predicated region
    $region6: #{cond_mlp_forward.1} parent=1 // pred_check
      _
    $region7: #{cond_mlp_forward.1} parent=1 // pred_check_branch
      %20 = sbr.rel (0) target = $region9
    $region8: #{cond_mlp_forward.1} parent=1 // pred_region
      _
    $region9: #{cond_mlp_forward.1} parent=1 // pred_fallthru
      _
    // Predicated region
    $region10: #{cond_mlp_forward.1} parent=1 // pred_check
      _
    $region11: #{cond_mlp_forward.1} parent=1 // pred_check_branch
      %22 = sbr.rel (0) target = $region13
    $region12: #{cond_mlp_forward.1} parent=1 // pred_region
      _
    $region13: #{cond_mlp_forward.1} parent=1 // pred_fallthru
      _
    // Predicated region
    $region14: #{cond_mlp_forward.1} parent=1 // pred_check
      _
    $region15: #{cond_mlp_forward.1} parent=1 // pred_check_branch
      %24 = sbr.rel (0) target = $region17
    $region16: #{cond_mlp_forward.1} parent=1 // pred_region
      _
    $region17: #{cond_mlp_forward.1} parent=1 // pred_fallthru
      _
    // Predicated region
    $region18: #{cond_mlp_forward.1} parent=1 // pred_check
      _
    $region19: #{cond_mlp_forward.1} parent=1 // pred_check_branch
      %26 = sbr.rel (0) target = $region21
    $region20: #{cond_mlp_forward.1} parent=1 // pred_region
      _
    $region21: #{cond_mlp_forward.1} parent=1 // pred_fallthru
      _
    // Predicated region
    $region22: #{cond_mlp_forward.1} parent=1 // pred_check
      _
    $region23: #{cond_mlp_forward.1} parent=1 // pred_check_branch
      %28 = sbr.rel (0) target = $region25
    $region24: #{cond_mlp_forward.1} parent=1 // pred_region
      _
    $region25: #{cond_mlp_forward.1} parent=1 // pred_fallthru
      _
    // Predicated region
    $region26: #{cond_mlp_forward.1} parent=1 // pred_check
      _
    $region27: #{cond_mlp_forward.1} parent=1 // pred_check_branch
      %30 = sbr.rel (0) target = $region29
    $region28: #{cond_mlp_forward.1} parent=1 // pred_region
      _
    $region29: #{cond_mlp_forward.1} parent=1 // pred_fallthru
      _
    // Predicated region
    $region30: #{cond_mlp_forward.1} parent=1 // pred_check
      _
    $region31: #{cond_mlp_forward.1} parent=1 // pred_check_branch
      %32 = sbr.rel (0) target = $region33
    $region32: #{cond_mlp_forward.1} parent=1 // pred_region
      _
    $region33: #{cond_mlp_forward.1} parent=1 // pred_fallthru
      _
    // Predicated region
    $region34: #{cond_mlp_forward.1} parent=1 // pred_check
      _
    $region35: #{cond_mlp_forward.1} parent=1 // pred_check_branch
      %34 = sbr.rel (0) target = $region37
    $region36: #{cond_mlp_forward.1} parent=1 // pred_region
      _
    $region37: #{cond_mlp_forward.1} parent=1 // pred_fallthru
      _
    // Predicated region
    $region38: #{cond_mlp_forward.1} parent=1 // pred_check
      _
    $region39: #{cond_mlp_forward.1} parent=1 // pred_check_branch
      %36 = sbr.rel (0) target = $region41
    $region40: #{cond_mlp_forward.1} parent=1 // pred_region
      _
    $region41: #{cond_mlp_forward.1} parent=1 // pred_fallthru
      _
    // Predicated region
    $region42: #{cond_mlp_forward.1} parent=1 // pred_check
      _
    $region43: #{cond_mlp_forward.1} parent=1 // pred_check_branch
      %38 = sbr.rel (0) target = $region45
    $region44: #{cond_mlp_forward.1} parent=1 // pred_region
      _
    $region45: #{cond_mlp_forward.1} parent=1 // pred_fallthru
      _
    %v39 = vld [vmem:[%s4] sm:$0x1]
    %v40 = vld [vmem:[%s6] sm:$0x1]
    %v41 = vld [vmem:[%s8] sm:$0x1]
    %v42 = vld [vmem:[%s10] sm:$0x1]
    %v43 = vld [vmem:[%s0] sm:$0xff]
    %v44 = vld [vmem:[%s1] sm:$0xff]
    %v45 = vld [vmem:[%s2] sm:$0xff]
    %v46 = vld [vmem:[%s3] sm:$0xf]
    %vm47 = vcmask 31744
    %v49 = vsel %vm47, %v44, 0
    %vm51 = vcmask 1043456
    %v53 = vsel %vm51, %v46, 0
    %55 = vmatpush.msra.mxu0 0.0
    %56 = vmatpush.msra.mxu0 0.0
    %57 = vmatpush.msra.mxu0 0.0
    %58 = vmatpush.msra.mxu0 0.0
    %59 = vmatpush.msra.mxu0 0.0
    %60 = vmatpush.msra.mxu0 0.0
    %61 = vmatpush.msra.mxu0 0.0
    %62 = vmatpush.msra.mxu0 0.0
    %63 = vmatpush.msra.mxu0 0.0
    %64 = vmatpush.msra.mxu0 0.0
    %65 = vmatpush.msra.mxu0 0.0
    %66 = vmatpush.msra.mxu0 0.0
    %67 = vmatpush.msra.mxu0 0.0
    %68 = vmatpush.msra.mxu0 0.0
    %69 = vmatpush.msra.mxu0 0.0
    %70 = vmatpush.msra.mxu0 %v53
    %71 = vmatmul.f32.gmra.mxu0 %v49
    %v72 = vpop.f32.mrf.mxu0
    %v73 = vadd.f32 0.0, %v72
    %74 = vdwg.mxu0
    %vm75 = vcmask 64512
    %v77 = vsel %vm75, %v43, 0
    %79 = vmatpush.msra.mxu0 0.0
    %80 = vmatpush.msra.mxu0 0.0
    %81 = vmatpush.msra.mxu0 0.0
    %82 = vmatpush.msra.mxu0 0.0
    %83 = vmatpush.msra.mxu0 0.0
    %84 = vmatpush.msra.mxu0 0.0
    %85 = vmatpush.msra.mxu0 0.0
    %86 = vmatpush.msra.mxu0 0.0
    %87 = vmatpush.msra.mxu0 0.0
    %88 = vmatpush.msra.mxu0 0.0
    %89 = vmatpush.msra.mxu0 0.0
    %90 = vmatpush.msra.mxu0 0.0
    %91 = vmatpush.msra.mxu0 0.0
    %92 = vmatpush.msra.mxu0 0.0
    %93 = vmatpush.msra.mxu0 0.0
    %94 = vmatpush.msra.mxu0 %v45
    %95 = vmatmul.f32.gmra.mxu0 %v77
    %v96 = vpop.f32.mrf.mxu0
    %v97 = vadd.f32 %v73, %v96
    %98 = vdwg.mxu0
    %v100 = vperm.slane %v39, 0
    %v102 = vadd.f32 %v97, %v100
    %vm103 = vcmp.gt.f32.partialorder %v102, 0.0
    %v104 = vmul.f32 %v102, 0.1
    %v105 = vsel %vm103, %v102, %v104
    %v106 = vld [vmem:[%s5] sm:$0xff]
    %v107 = vld [vmem:[%s5 + $0x8] sm:$0xff]
    %v108 = vld [vmem:[%s5 + $0x10] sm:$0xff]
    %v109 = vld [vmem:[%s5 + $0x18] sm:$0xff]
    %v110 = vld [vmem:[%s5 + $0x20] sm:$0xff]
    %v111 = vld [vmem:[%s5 + $0x28] sm:$0xff]
    %v112 = vld [vmem:[%s5 + $0x30] sm:$0xff]
    %v113 = vld [vmem:[%s5 + $0x38] sm:$0xff]
    %v114 = vld [vmem:[%s5 + $0x40] sm:$0xff]
    %v115 = vld [vmem:[%s5 + $0x48] sm:$0xff]
    %v116 = vld [vmem:[%s5 + $0x50] sm:$0xff]
    %v117 = vld [vmem:[%s5 + $0x58] sm:$0xff]
    %v118 = vld [vmem:[%s5 + $0x60] sm:$0xff]
    %v119 = vld [vmem:[%s5 + $0x68] sm:$0xff]
    %v120 = vld [vmem:[%s5 + $0x70] sm:$0xff]
    %v121 = vld [vmem:[%s5 + $0x78] sm:$0xff]
    %v123 = vperm.slane %v40, 0
    %125 = vmatpush.msra.mxu0 %v121
    %126 = vmatpush.msra.mxu0 %v120
    %127 = vmatpush.msra.mxu0 %v119
    %128 = vmatpush.msra.mxu0 %v118
    %129 = vmatpush.msra.mxu0 %v117
    %130 = vmatpush.msra.mxu0 %v116
    %131 = vmatpush.msra.mxu0 %v115
    %132 = vmatpush.msra.mxu0 %v114
    %133 = vmatpush.msra.mxu0 %v113
    %134 = vmatpush.msra.mxu0 %v112
    %135 = vmatpush.msra.mxu0 %v111
    %136 = vmatpush.msra.mxu0 %v110
    %137 = vmatpush.msra.mxu0 %v109
    %138 = vmatpush.msra.mxu0 %v108
    %139 = vmatpush.msra.mxu0 %v107
    %140 = vmatpush.msra.mxu0 %v106
    %141 = vmatmul.f32.gmra.mxu0 %v105
    %v142 = vpop.f32.mrf.mxu0
    %v143 = vadd.f32 %v123, %v142
    %144 = vdwg.mxu0
    %vm145 = vcmp.gt.f32.partialorder %v143, 0.0
    %v146 = vmul.f32 %v143, 0.1
    %v147 = vsel %vm145, %v143, %v146
    %v148 = vld [vmem:[%s7] sm:$0xff]
    %v149 = vld [vmem:[%s7 + $0x8] sm:$0xff]
    %v150 = vld [vmem:[%s7 + $0x10] sm:$0xff]
    %v151 = vld [vmem:[%s7 + $0x18] sm:$0xff]
    %v152 = vld [vmem:[%s7 + $0x20] sm:$0xff]
    %v153 = vld [vmem:[%s7 + $0x28] sm:$0xff]
    %v154 = vld [vmem:[%s7 + $0x30] sm:$0xff]
    %v155 = vld [vmem:[%s7 + $0x38] sm:$0xff]
    %v156 = vld [vmem:[%s7 + $0x40] sm:$0xff]
    %v157 = vld [vmem:[%s7 + $0x48] sm:$0xff]
    %v158 = vld [vmem:[%s7 + $0x50] sm:$0xff]
    %v159 = vld [vmem:[%s7 + $0x58] sm:$0xff]
    %v160 = vld [vmem:[%s7 + $0x60] sm:$0xff]
    %v161 = vld [vmem:[%s7 + $0x68] sm:$0xff]
    %v162 = vld [vmem:[%s7 + $0x70] sm:$0xff]
    %v163 = vld [vmem:[%s7 + $0x78] sm:$0xff]
    %v165 = vperm.slane %v41, 0
    %167 = vmatpush.msra.mxu0 %v163
    %168 = vmatpush.msra.mxu0 %v162
    %169 = vmatpush.msra.mxu0 %v161
    %170 = vmatpush.msra.mxu0 %v160
    %171 = vmatpush.msra.mxu0 %v159
    %172 = vmatpush.msra.mxu0 %v158
    %173 = vmatpush.msra.mxu0 %v157
    %174 = vmatpush.msra.mxu0 %v156
    %175 = vmatpush.msra.mxu0 %v155
    %176 = vmatpush.msra.mxu0 %v154
    %177 = vmatpush.msra.mxu0 %v153
    %178 = vmatpush.msra.mxu0 %v152
    %179 = vmatpush.msra.mxu0 %v151
    %180 = vmatpush.msra.mxu0 %v150
    %181 = vmatpush.msra.mxu0 %v149
    %182 = vmatpush.msra.mxu0 %v148
    %183 = vmatmul.f32.gmra.mxu0 %v147
    %v184 = vpop.f32.mrf.mxu0
    %v185 = vadd.f32 %v165, %v184
    %186 = vdwg.mxu0
    %vm187 = vcmp.gt.f32.partialorder %v185, 0.0
    %v188 = vmul.f32 %v185, 0.1
    %v189 = vsel %vm187, %v185, %v188
    %v190 = vld [vmem:[%s9] sm:$0xff]
    %v191 = vld [vmem:[%s9 + $0x8] sm:$0xff]
    %v192 = vld [vmem:[%s9 + $0x10] sm:$0xff]
    %v193 = vld [vmem:[%s9 + $0x18] sm:$0xff]
    %v194 = vld [vmem:[%s9 + $0x20] sm:$0xff]
    %v195 = vld [vmem:[%s9 + $0x28] sm:$0xff]
    %v196 = vld [vmem:[%s9 + $0x30] sm:$0xff]
    %v197 = vld [vmem:[%s9 + $0x38] sm:$0xff]
    %v198 = vld [vmem:[%s9 + $0x40] sm:$0xff]
    %v199 = vld [vmem:[%s9 + $0x48] sm:$0xff]
    %v200 = vld [vmem:[%s9 + $0x50] sm:$0xff]
    %v201 = vld [vmem:[%s9 + $0x58] sm:$0xff]
    %v202 = vld [vmem:[%s9 + $0x60] sm:$0xff]
    %v203 = vld [vmem:[%s9 + $0x68] sm:$0xff]
    %v204 = vld [vmem:[%s9 + $0x70] sm:$0xff]
    %v205 = vld [vmem:[%s9 + $0x78] sm:$0xff]
    %v207 = vperm.slane %v42, 0
    %209 = vmatpush.msra.mxu0 %v205
    %210 = vmatpush.msra.mxu0 %v204
    %211 = vmatpush.msra.mxu0 %v203
    %212 = vmatpush.msra.mxu0 %v202
    %213 = vmatpush.msra.mxu0 %v201
    %214 = vmatpush.msra.mxu0 %v200
    %215 = vmatpush.msra.mxu0 %v199
    %216 = vmatpush.msra.mxu0 %v198
    %217 = vmatpush.msra.mxu0 %v197
    %218 = vmatpush.msra.mxu0 %v196
    %219 = vmatpush.msra.mxu0 %v195
    %220 = vmatpush.msra.mxu0 %v194
    %221 = vmatpush.msra.mxu0 %v193
    %222 = vmatpush.msra.mxu0 %v192
    %223 = vmatpush.msra.mxu0 %v191
    %224 = vmatpush.msra.mxu0 %v190
    %225 = vmatmul.f32.gmra.mxu0 %v189
    %v226 = vpop.f32.mrf.mxu0
    %v227 = vadd.f32 %v207, %v226
    %228 = vdwg.mxu0
    %229 = vst [vmem:[#allocation2] sm:$0xff] %v227
    // Predicated region
    $region46: #{cond_mlp_forward.1} parent=1 // pred_check
      _
    $region47: #{cond_mlp_forward.1} parent=1 // pred_check_branch
      %231 = sbr.rel (0) target = $region49
    $region48: #{cond_mlp_forward.1} parent=1 // pred_region
      %233 = vsyncadd [#allocation3], 0
      %s235 = sshll.u32 [#allocation2], 4
      %s236 = int_to_ptr.vmem [resolvable:$true] %s235
      %s237 = sshll.u32 %s11, 4
      %s238 = int_to_ptr.hbm [resolvable:$true] %s237
      %240 = dma.vmem_to_hbm [thread:$0]  %s236, 128, %s238, [#allocation3]
    $region49: #{cond_mlp_forward.1} parent=1 // pred_fallthru
      _
    // Predicated region
    $region50: #{cond_mlp_forward.1} parent=1 // pred_check
      _
    $region51: #{cond_mlp_forward.1} parent=1 // pred_check_branch
      %242 = sbr.rel (0) target = $region53
    $region52: #{cond_mlp_forward.1} parent=1 // pred_region
      %244 = dma.done [#allocation3], 128
    $region53: #{cond_mlp_forward.1} parent=1 // pred_fallthru
      _
    %245 = vsyncpa [#allocation3], 1

</llo_original>
